<compile_context>
chip_gen: v7x
topology: tpu7x:2x2x1
jax: 0.10.0
libtpu: 0.0.40
codegen_flags: <defaults>
</compile_context>

<pallas_src>
from functools import partial

import numpy as np
import jax
import jax.numpy as jnp
from jax import lax
from jax.experimental import pallas as pl
from jax.experimental.pallas import tpu as pltpu


def _round_up(x, m):
    return (x + m - 1) // m * m


# ----------------------------------------------------------------------------
# AvgPool2d(3, 1, 1), count_include_pad=True, separable, NHWC (C on lanes)
# ----------------------------------------------------------------------------
def _avgpool3x3_kernel(xp_ref, o_ref):
    x = xp_ref[...]                                  # (1, H+2, W+2, C)
    H, W = o_ref.shape[1], o_ref.shape[2]
    # separable 3-tap sums: shifts only along H/W (non-lane axes)
    row = x[:, :, 0:W, :] + x[:, :, 1:W + 1, :] + x[:, :, 2:W + 2, :]
    out = row[:, 0:H, :, :] + row[:, 1:H + 1, :, :] + row[:, 2:H + 2, :, :]
    o_ref[...] = out * (1.0 / 9.0)                   # count_include_pad=True


def avg_pool_3x3_s1_p1_nhwc(x_nhwc):
    """torch.nn.AvgPool2d(3, 1, 1) equivalent, NHWC in / NHWC out."""
    B, H, W, C = x_nhwc.shape
    xp = jnp.pad(x_nhwc, ((0, 0), (1, 1), (1, 1), (0, 0)))
    # TODO(synk): for large feature maps, tile over rows with a 1-row halo
    # instead of one whole padded image per grid step.
    return pl.pallas_call(
        _avgpool3x3_kernel,
        grid=(B,),
        in_specs=[pl.BlockSpec((1, H + 2, W + 2, C), lambda b: (b, 0, 0, 0))],
        out_specs=pl.BlockSpec((1, H, W, C), lambda b: (b, 0, 0, 0)),
        out_shape=jax.ShapeDtypeStruct((B, H, W, C), jnp.float32),
        compiler_params=pltpu.CompilerParams(
            dimension_semantics=("parallel",)),
    )(xp)


# ----------------------------------------------------------------------------
# Fused my_cdist + topk(largest=False): bf16 MXU matmul, fp32 epilogue,
# running per-row top-k carried in VMEM across memory-bank tiles.
# ----------------------------------------------------------------------------
def _cdist_topk_kernel(x1n_ref, x2n_ref, x1_ref, x2t_ref, o_ref, best_ref):
    j = pl.program_id(1)
    k = best_ref.shape[1]

    @pl.when(j == 0)
    def _init():
        best_ref[...] = jnp.full_like(best_ref, jnp.inf)

    # bf16 MXU cross-term, fp32 accumulation; norms precomputed outside.
    xm = jnp.dot(x1_ref[...], x2t_ref[...],
                 preferred_element_type=jnp.float32)           # (tn, tm)
    d2 = (x2n_ref[...] - 2.0 * xm) + x1n_ref[...]              # squared dist

    # Merge running best (tn, k) with this tile's candidates (tn, tm):
    # iterative lock-step selection (VPU where/select + XLU lane-min only;
    # no lane-axis concatenation needed).
    best = best_ref[...]
    col_b = lax.broadcasted_iota(jnp.int32, best.shape, 1)
    new_best = jnp.zeros(best.shape, jnp.float32)
    for ki in range(k):
        mb = jnp.min(best, axis=1, keepdims=True)
        md = jnp.min(d2, axis=1, keepdims=True)
        take_b = mb <= md
        val = jnp.where(take_b, mb, md)
        new_best = jnp.where(col_b == ki, val, new_best)
        best = jnp.where(jnp.logical_and(take_b, best == mb), jnp.inf, best)
        d2 = jnp.where(jnp.logical_and(jnp.logical_not(take_b), d2 == md),
                       jnp.inf, d2)
    best_ref[...] = new_best

    @pl.when(j == pl.num_programs(1) - 1)
    def _fin():
        # sqrt after selection (monotone), only N*k EUP work.
        o_ref[...] = jnp.sqrt(jnp.maximum(best_ref[...], 1e-30))


def cdist_topk_pallas(x1, bank_t_bf16, bank_norms, k):
    """k smallest sqrt(clamp(||x1||^2 - 2 x1 x2^T + ||x2||^2, 1e-30)) per row,
    ascending (== torch.topk(largest=False) values).  Never materializes the
    full (N, M) distance matrix in HBM."""
    N, E = x1.shape
    e_pad, m_pad = bank_t_bf16.shape

    if N > 128:
        n_pad, tile_n = _round_up(N, 128), 128
    elif N == 128:
        n_pad, tile_n = 128, 64          # >=2 parallel row tiles (v7x megacore)
    else:
        n_pad = _round_up(max(N, 8), 8)
        tile_n = n_pad

    if m_pad % 512 == 0:                 # wide bank tiles fill 256-wide MXUs
        tile_m = 512
    elif m_pad % 256 == 0:
        tile_m = 256
    else:
        tile_m = 128

    x1p = jnp.pad(x1, ((0, n_pad - N), (0, e_pad - E)))
    x1n = jnp.sum(x1p * x1p, axis=-1, keepdims=True)           # fp32, hoisted
    x1b = x1p.astype(jnp.bfloat16)

    out = pl.pallas_call(
        _cdist_topk_kernel,
        grid=(n_pad // tile_n, m_pad // tile_m),
        in_specs=[
            pl.BlockSpec((tile_n, 1), lambda i, j: (i, 0)),
            pl.BlockSpec((1, tile_m), lambda i, j: (0, j)),
            pl.BlockSpec((tile_n, e_pad), lambda i, j: (i, 0)),
            pl.BlockSpec((e_pad, tile_m), lambda i, j: (0, j)),
        ],
        out_specs=pl.BlockSpec((tile_n, k), lambda i, j: (i, 0)),
        out_shape=jax.ShapeDtypeStruct((n_pad, k), jnp.float32),
        scratch_shapes=[pltpu.VMEM((tile_n, k), jnp.float32)],
        compiler_params=pltpu.CompilerParams(
            dimension_semantics=("parallel", "arbitrary")),
    )(x1n, bank_norms, x1b, bank_t_bf16)
    return out[:N]


# ----------------------------------------------------------------------------
# Fused nearest-upsample + Gaussian blur: two batched lane-dense MXU matmuls
# ----------------------------------------------------------------------------
def _upsample_blur_kernel(xr_ref, lwt_ref, lhbd_ref, o_ref):
    # (B*h, w) @ (w, OWp) -> (B*h, OWp);  blockdiag(Lh) @ . -> (B*OH, OWp)
    t = jnp.dot(xr_ref[...], lwt_ref[...], preferred_element_type=jnp.float32)
    o_ref[...] = jnp.dot(lhbd_ref[...], t.astype(jnp.bfloat16),
                         preferred_element_type=jnp.float32)


def _gauss_1d(ksize, sigma):
    xs = np.arange(ksize, dtype=np.float64)
    g = np.exp(-((xs - (ksize - 1) / 2.0) ** 2) / (2.0 * sigma ** 2))
    return g / g.sum()


def _reflect_index(j, n):
    """PyTorch/kornia 'reflect' border (no edge repeat)."""
    if n == 1:
        return 0
    while j < 0 or j >= n:
        if j < 0:
            j = -j
        if j >= n:
            j = 2 * (n - 1) - j
    return j


def _blur_upsample_matrix(out_size, in_size, sigma):
    """(Gaussian blur, reflect border) @ (nearest upsample) as one matrix."""
    ksize = 2 * int(4.0 * sigma + 0.5) + 1
    pad = (ksize - 1) // 2
    g = _gauss_1d(ksize, sigma)
    G = np.zeros((out_size, out_size), np.float64)
    for i in range(out_size):
        for kk in range(ksize):
            j = _reflect_index(i + kk - pad, out_size)
            G[i, j] += g[kk]
    U = np.zeros((out_size, in_size), np.float64)
    src = (np.arange(out_size) * in_size) // out_size          # nearest: floor
    U[np.arange(out_size), src] = 1.0
    return (G @ U).astype(np.float32)                          # (out, in)


# ----------------------------------------------------------------------------
# Glue (stand-in backbone, nearest interpolation for embedding concat)
# ----------------------------------------------------------------------------
def conv2d_relu_nhwc(x_nhwc, w_hwio, b, stride):
    """3x3 conv (pad=1) + ReLU, NHWC.  Stand-in backbone stage."""
    out = lax.conv_general_dilated(
        x_nhwc, w_hwio, window_strides=(stride, stride),
        padding=((1, 1), (1, 1)),
        dimension_numbers=("NHWC", "HWIO", "NHWC"))
    return jax.nn.relu(out + b)


def interpolate_nearest_nhwc(x_nhwc, out_hw):
    """F.interpolate(mode='nearest') semantics: src = floor(dst * in / out)."""
    B, H, W, C = x_nhwc.shape
    OH, OW = out_hw
    rows = (jnp.arange(OH) * H // OH).astype(jnp.int32)
    cols = (jnp.arange(OW) * W // OW).astype(jnp.int32)
    return x_nhwc[:, rows[:, None], cols[None, :], :]


class PatchcorePallas:
    """JAX/Pallas re-implementation of PatchcoreModel's forward pass."""

    def __init__(self, input_size, num_neighbors=9, memory_size=128, key=None):
        self.input_size = tuple(input_size)
        self.num_neighbors = num_neighbors
        self.sigma = 4.0
        key = jax.random.PRNGKey(0) if key is None else key
        k1, k2, k3, k4, k5 = jax.random.split(key, 5)

        # TODO(synk): pretrained wide_resnet50_2 backbone has no clean Pallas
        # equivalent; replaced by a deterministic 2-stage NHWC conv stand-in
        # producing 'layer2' / 'layer3' style feature maps (strides 4 and 8).
        self.c2, self.c3 = 64, 64                   # E = 128 (lane-dense)
        self.w1 = 0.1 * jax.random.normal(k1, (3, 3, 3, self.c2), jnp.float32)
        self.b1 = 0.01 * jax.random.normal(k2, (self.c2,), jnp.float32)
        self.w2 = 0.1 * jax.random.normal(k3, (3, 3, self.c2, self.c3), jnp.float32)
        self.b2 = 0.01 * jax.random.normal(k4, (self.c3,), jnp.float32)

        emb_dim = self.c2 + self.c3
        # memory_bank buffer, deterministically initialized (synthetic coreset).
        self.memory_bank = jax.random.normal(k5, (memory_size, emb_dim),
                                             jnp.float32)
        # Pre-pad / pre-transpose / pre-cast the (static) memory bank once:
        # bf16 (E_pad, M_pad) MXU operand + fp32 norms; padded columns get a
        # huge norm so they can never win the top-k.
        m_pad = _round_up(memory_size, 128)
        e_pad = _round_up(emb_dim, 128)
        bank_p = jnp.pad(self.memory_bank,
                         ((0, m_pad - memory_size), (0, e_pad - emb_dim)))
        norms = jnp.sum(bank_p * bank_p, axis=-1)
        norms = jnp.where(jnp.arange(m_pad) < memory_size, norms, 1e30)
        self._bank_norms = norms.reshape(1, m_pad).astype(jnp.float32)
        self._bank_t_bf16 = bank_p.astype(jnp.bfloat16).T      # (e_pad, m_pad)

        self._ub_cache = {}                          # cached upsample/blur mats

    # ---- feature extractor (stand-in backbone, NHWC) ----
    def feature_extractor(self, x_nchw):
        x = jnp.transpose(x_nchw, (0, 2, 3, 1))      # single NCHW->NHWC at entry
        f2 = conv2d_relu_nhwc(x, self.w1, self.b1, stride=4)    # 'layer2'
        f3 = conv2d_relu_nhwc(f2, self.w2, self.b2, stride=2)   # 'layer3'
        return {"layer2": f2, "layer3": f3}

    def generate_embedding(self, features):
        emb = features["layer2"]
        l3 = interpolate_nearest_nhwc(features["layer3"], emb.shape[1:3])
        return jnp.concatenate([emb, l3], axis=-1)   # concat on lane axis

    @staticmethod
    def reshape_embedding(embedding_nhwc):
        # NHWC layout makes torch's permute(0,2,3,1).reshape(-1, E) a free reshape.
        return embedding_nhwc.reshape(-1, embedding_nhwc.shape[-1])

    def nearest_neighbors(self, embedding):
        return cdist_topk_pallas(embedding, self._bank_t_bf16, self._bank_norms,
                                 k=self.num_neighbors)

    # ---- AnomalyMapGenerator ----
    def _get_upsample_blur_mats(self, batch, h, w):
        key = (batch, h, w)
        if key not in self._ub_cache:
            OH, OW = self.input_size
            ow_pad = _round_up(OW, 128)
            lh = _blur_upsample_matrix(OH, h, self.sigma)        # (OH, h)
            lw = _blur_upsample_matrix(OW, w, self.sigma)        # (OW, w)
            lwt = np.zeros((w, ow_pad), np.float32)
            lwt[:, :OW] = lw.T
            lh_bd = np.kron(np.eye(batch, dtype=np.float32),
                            lh).astype(np.float32)               # (B*OH, B*h)
            self._ub_cache[key] = (jnp.asarray(lh_bd, jnp.bfloat16),
                                   jnp.asarray(lwt, jnp.bfloat16))
        return self._ub_cache[key]

    def upsample_blur(self, amap_bhw):
        """F.interpolate(nearest) + GaussianBlur2d fused, whole batch at once."""
        B, h, w = amap_bhw.shape
        OH, OW = self.input_size
        ow_pad = _round_up(OW, 128)
        lh_bd, lwt = self._get_upsample_blur_mats(B, h, w)
        xr = amap_bhw.reshape(B * h, w).astype(jnp.bfloat16)
        out = pl.pallas_call(
            _upsample_blur_kernel,
            grid=(1,),
            in_specs=[
                pl.BlockSpec((B * h, w), lambda i: (0, 0)),
                pl.BlockSpec((w, ow_pad), lambda i: (0, 0)),
                pl.BlockSpec((B * OH, B * h), lambda i: (0, 0)),
            ],
            out_specs=pl.BlockSpec((B * OH, ow_pad), lambda i: (0, 0)),
            out_shape=jax.ShapeDtypeStruct((B * OH, ow_pad), jnp.float32),
        )(xr, lwt, lh_bd)
        return out[:, :OW].reshape(B, OH, OW)

    def compute_anomaly_map(self, patch_scores, feature_map_shape, batch):
        h, w = feature_map_shape
        amap = patch_scores[:, 0].reshape(batch, h, w)
        amap = self.upsample_blur(amap)
        return amap.reshape(batch, 1, *self.input_size)

    @staticmethod
    def compute_anomaly_score(patch_scores):
        s0 = patch_scores[:, 0]
        idx = jnp.argmax(s0)
        confidence = patch_scores[idx]
        e = jnp.exp(confidence - jnp.max(confidence))   # stable softmax form
        weights = 1.0 - (jnp.max(e) / jnp.sum(e))
        return weights * jnp.max(s0)

    # ---- forward ----
    def forward(self, input_tensor, training=False):
        features = self.feature_extractor(input_tensor)
        features = {name: avg_pool_3x3_s1_p1_nhwc(feat)
                    for name, feat in features.items()}
        embedding = self.generate_embedding(features)    # (B, h, w, E)
        feature_map_shape = embedding.shape[1:3]
        batch = embedding.shape[0]
        embedding = self.reshape_embedding(embedding)     # (B*h*w, E)
        if training:
            return embedding
        patch_scores = self.nearest_neighbors(embedding)  # fused cdist + top-k
        anomaly_map = self.compute_anomaly_map(patch_scores, feature_map_shape,
                                               batch)
        anomaly_score = self.compute_anomaly_score(patch_scores)
        return anomaly_map, anomaly_score


if __name__ == "__main__":
    key = jax.random.PRNGKey(0)
    k_in, k_model = jax.random.split(key)
    x = jax.random.normal(k_in, (2, 3, 32, 32), jnp.float32)   # NCHW input

    model = PatchcorePallas(input_size=(32, 32), num_neighbors=9,
                            memory_size=128, key=k_model)

    # training path -> embedding (Batch*Patch*Patch, Embedding)
    embedding = jax.block_until_ready(model.forward(x, training=True))
    assert embedding.shape == (2 * 8 * 8, 128)

    # eval path -> (anomaly_map, anomaly_score)
    anomaly_map, anomaly_score = model.forward(x, training=False)
    anomaly_map = jax.block_until_ready(anomaly_map)
    anomaly_score = jax.block_until_ready(anomaly_score)
    assert anomaly_map.shape == (2, 1, 32, 32)
    assert anomaly_score.shape == ()
    assert bool(jnp.isfinite(anomaly_score))

    print("KERNEL_OK")
</pallas_src>

<mosaic_0001>
module attributes {stable_mosaic.version = 11 : i64} {
  func.func @_avgpool3x3_kernel(%arg0: i32, %arg1: memref<1x10x10x64xf32, #tpu.memory_space<vmem>>, %arg2: memref<1x8x8x64xf32, #tpu.memory_space<vmem>>) attributes {dimension_semantics = [#tpu.dimension_semantics<parallel>], iteration_bounds = array<i64: 2>, scalar_prefetch = 0 : i64, scratch_operands = 0 : i64, tpu.core_type = #tpu.core_type<tc>, window_params = [{transform_indices = @transform_0, window_bounds = array<i64: 1, 10, 10, 64>}, {transform_indices = @transform_1, window_bounds = array<i64: 1, 8, 8, 64>}]} {
    %c0 = arith.constant 0 : index
    %c0_0 = arith.constant 0 : index
    %c0_1 = arith.constant 0 : index
    %c0_2 = arith.constant 0 : index
    %0 = vector.load %arg1[%c0, %c0_0, %c0_1, %c0_2] : memref<1x10x10x64xf32, #tpu.memory_space<vmem>>, vector<1x10x10x64xf32>
    %1 = vector.extract_strided_slice %0 {offsets = [0, 0, 0, 0], sizes = [1, 10, 8, 64], strides = [1, 1, 1, 1]} : vector<1x10x10x64xf32> to vector<1x10x8x64xf32>
    %2 = vector.extract_strided_slice %0 {offsets = [0, 0, 1, 0], sizes = [1, 10, 8, 64], strides = [1, 1, 1, 1]} : vector<1x10x10x64xf32> to vector<1x10x8x64xf32>
    %3 = arith.addf %1, %2 : vector<1x10x8x64xf32>
    %4 = vector.extract_strided_slice %0 {offsets = [0, 0, 2, 0], sizes = [1, 10, 8, 64], strides = [1, 1, 1, 1]} : vector<1x10x10x64xf32> to vector<1x10x8x64xf32>
    %5 = arith.addf %3, %4 : vector<1x10x8x64xf32>
    %6 = vector.extract_strided_slice %5 {offsets = [0, 0, 0, 0], sizes = [1, 8, 8, 64], strides = [1, 1, 1, 1]} : vector<1x10x8x64xf32> to vector<1x8x8x64xf32>
    %7 = vector.extract_strided_slice %5 {offsets = [0, 1, 0, 0], sizes = [1, 8, 8, 64], strides = [1, 1, 1, 1]} : vector<1x10x8x64xf32> to vector<1x8x8x64xf32>
    %8 = arith.addf %6, %7 : vector<1x8x8x64xf32>
    %9 = vector.extract_strided_slice %5 {offsets = [0, 2, 0, 0], sizes = [1, 8, 8, 64], strides = [1, 1, 1, 1]} : vector<1x10x8x64xf32> to vector<1x8x8x64xf32>
    %10 = arith.addf %8, %9 : vector<1x8x8x64xf32>
    %cst = arith.constant 0.111111112 : f32
    %11 = vector.broadcast %cst : f32 to vector<1x8x8x64xf32>
    %12 = arith.mulf %10, %11 : vector<1x8x8x64xf32>
    %c0_3 = arith.constant 0 : index
    %c0_4 = arith.constant 0 : index
    %c0_5 = arith.constant 0 : index
    %c0_6 = arith.constant 0 : index
    %13 = vector.load %arg2[%c0_3, %c0_4, %c0_5, %c0_6] : memref<1x8x8x64xf32, #tpu.memory_space<vmem>>, vector<1x8x8x64xf32>
    tpu.vector_store %arg2[%c0_3, %c0_4, %c0_5, %c0_6], %12 {strides = array<i32>} : memref<1x8x8x64xf32, #tpu.memory_space<vmem>>, vector<1x8x8x64xf32>,
    return
  }
  func.func @transform_0(%arg0: i32) -> (i32, i32, i32, i32) {
    %c0_i32 = arith.constant 0 : i32
    %c0_i32_0 = arith.constant 0 : i32
    %c0_i32_1 = arith.constant 0 : i32
    %c0_i32_2 = arith.constant 0 : i32
    return %arg0, %c0_i32, %c0_i32_0, %c0_i32_1 : i32, i32, i32, i32
  }
  func.func @transform_1(%arg0: i32) -> (i32, i32, i32, i32) {
    %c0_i32 = arith.constant 0 : i32
    %c0_i32_0 = arith.constant 0 : i32
    %c0_i32_1 = arith.constant 0 : i32
    %c0_i32_2 = arith.constant 0 : i32
    return %arg0, %c0_i32, %c0_i32_0, %c0_i32_1 : i32, i32, i32, i32
  }
}

</mosaic_0001>

<llo_original>
// kernel: tpu_custom_call.1
$region0: #{tpu_custom_call.1}
  #allocation0 [shape = 'u32[]', space=smem, size = 0x4, offset = 0x4, fixed_abs, tag = 'smem constant byte address 0x4 - core index']
  #allocation1 [shape = 'u32[144,128]{1,0:T(1,128)}', space=vmem, size = 0x12000, scoped, tag = 'internal scratch']
  %s0 = inlined_call_operand.vmem [shape: f32[2,10,10,64], index: 0, kind: input, shape index: {}]
  %s1 = inlined_call_operand.hbm [shape: f32[2,8,8,64], index: 1, kind: output, shape index: {}]
  %s2 = sld [smem:[#allocation0]]
  $region37: #{tpu_custom_call.1} parent=0
    _
  %s4 = ssub.s32 1, %s2
  %s5 = scalar_select 0, %s4, %s2
  $region1: #{tpu_custom_call.1} parent=0
    #allocation2 [shape = 'u8[65536]{0}', space=vmem, size = 0x10000, scoped, tag = 'output window, operand 0']
    #allocation3 [shape = 's32[2]{0}', space=sflag, size = 0x8, scoped, tag = 'scoped memory for tpu_custom_call.1']
    %6 = vsyncpa [#allocation3], 0
    %s7 = scalar_lea.sflag [#allocation3], 1
    %8 = vsyncpa %s7, 0
    loop: start=0, step=1, limit=4
    $region2: #{tpu_custom_call.1} parent=1 // loop_pre_header
      _
    $region3: #{tpu_custom_call.1} parent=1 // loop_header
      %s10 = sphi 0, %s14
      %p11 = scmp.ge.s32.totalorder %s10, 4
      %s20 = sphi 0, %s22
      %s23 = sphi 0, %s20
      %s24 = sphi 0, %s23
      %s40 = sphi 0, %s24
      %s46 = sphi 0, %s48
      %s49 = sphi 0, %s46
      %s50 = sphi 0, %s49
      %s66 = sphi 0, %s50
    $region4: #{tpu_custom_call.1} parent=1 // loop_header_branch
      %13 = sbr.rel (%p11) target = $region8
    $region5: #{tpu_custom_call.1} parent=1 // loop_body
      %s15 = ssub.s32 %s10, 1
      %s16 = ssub.s32 %s10, 2
      %s17 = sadd.s32 %s10, 1
      %s18 = ssub.s32 %s10, %s17
      %p19 = scmp.eq.s32.totalorder %s18, 0
      %s21 = sadd.s32 %s20, 1
      %s22 = scalar_select %p19, %s20, %s21
      %p25 = pneg %p19
      %p26 = scmp.eq.s32.totalorder %s10, 1
      %p27 = por %p25, %p26
      %p28 = scmp.ne.s32.totalorder %s20, %s23
      %p29 = scmp.eq.s32.totalorder %s10, 0
      %p30 = por %p28, %p29
      %p31 = scmp.ne.s32.totalorder %s20, %s23
      %p32 = scmp.eq.s32.totalorder %s15, 1
      %p33 = por %p31, %p32
      %p34 = scmp.ne.s32.totalorder %s23, %s24
      %p35 = scmp.eq.s32.totalorder %s15, 0
      %p36 = por %p34, %p35
      %p37 = scmp.ne.s32.totalorder %s23, %s24
      %p38 = scmp.eq.s32.totalorder %s16, 1
      %p39 = por %p37, %p38
      %p41 = scmp.ne.s32.totalorder %s24, %s40
      %p42 = scmp.eq.s32.totalorder %s16, 0
      %p43 = por %p41, %p42
      %s44 = ssub.s32 %s10, %s17
      %p45 = scmp.eq.s32.totalorder %s44, 0
      %s47 = sadd.s32 %s46, 1
      %s48 = scalar_select %p45, %s46, %s47
      %p51 = pneg %p45
      %p52 = scmp.eq.s32.totalorder %s10, 1
      %p53 = por %p51, %p52
      %p54 = scmp.ne.s32.totalorder %s46, %s49
      %p55 = scmp.eq.s32.totalorder %s10, 0
      %p56 = por %p54, %p55
      %p57 = scmp.ne.s32.totalorder %s46, %s49
      %p58 = scmp.eq.s32.totalorder %s15, 1
      %p59 = por %p57, %p58
      %p60 = scmp.ne.s32.totalorder %s49, %s50
      %p61 = scmp.eq.s32.totalorder %s15, 0
      %p62 = por %p60, %p61
      %p63 = scmp.ne.s32.totalorder %s49, %s50
      %p64 = scmp.eq.s32.totalorder %s16, 1
      %p65 = por %p63, %p64
      %p67 = scmp.ne.s32.totalorder %s50, %s66
      %p68 = scmp.eq.s32.totalorder %s16, 0
      %p69 = por %p67, %p68
      %p70 = scmp.le.s32.totalorder 1, %s10
      %p71 = scmp.lt.s32.totalorder %s10, 3
      %p72 = pnand %p70, %p71
      %p73 = pneg %p72
      // Predicated region
      $region9: #{tpu_custom_call.1} parent=5 // pred_check
        _
      $region10: #{tpu_custom_call.1} parent=5 // pred_check_branch
        %75 = sbr.rel (%p72) target = $region12
      $region11: #{tpu_custom_call.1} parent=5 // pred_region
        %s76 = ssub.s32 %s10, 1
      $region12: #{tpu_custom_call.1} parent=5 // pred_fallthru
        _
      %p77 = scmp.lt.s32.totalorder %s10, 2
      // Predicated region
      $region13: #{tpu_custom_call.1} parent=5 // pred_check
        %p78 = pneg %p77
      $region14: #{tpu_custom_call.1} parent=5 // pred_check_branch
        %80 = sbr.rel (%p78) target = $region16
      $region15: #{tpu_custom_call.1} parent=5 // pred_region
        // Predicated region
        $region17: #{tpu_custom_call.1} parent=15 // pred_check
          %p81 = pneg %p30
        $region18: #{tpu_custom_call.1} parent=15 // pred_check_branch
          %83 = sbr.rel (%p81) target = $region20
        $region19: #{tpu_custom_call.1} parent=15 // pred_region
          %p84 = scmp.lt.s32.totalorder %s10, 1
          %s85 = scalar_select %p84, %s10, 1
          %s86 = smul.addr %s85, 20
          %s87 = smul.addr %s86, 8
          %s88 = scalar_lea.vmem %s0, %s87
        $region20: #{tpu_custom_call.1} parent=15 // pred_fallthru
          _
      $region16: #{tpu_custom_call.1} parent=5 // pred_fallthru
        _
      %p89 = scmp.le.s32.totalorder 1, %s10
      %p90 = scmp.lt.s32.totalorder %s10, 3
      %p91 = pnand %p89, %p90
      %p92 = pneg %p91
      // Predicated region
      $region21: #{tpu_custom_call.1} parent=5 // pred_check
        _
      $region22: #{tpu_custom_call.1} parent=5 // pred_check_branch
        %94 = sbr.rel (%p91) target = $region24
      $region23: #{tpu_custom_call.1} parent=5 // pred_region
        %s95 = ssub.s32 %s10, 1
        %p96 = scmp.lt.s32.totalorder %s15, 1
        %s97 = scalar_select %p96, %s15, 1
        %s98 = smul.addr %s97, 20
        %s99 = smul.addr %s98, 8
        %s100 = scalar_lea.vmem %s0, %s99
        %p101 = pneg %p36
        %p102 = pneg %p33
        %p103 = pneg %p62
        %p104 = pneg %p59
        %s105 = sand.u32 %s49, 1
        %s106 = scalar_lea.sflag [#allocation3], %s105
        %s107 = sand.u32 %s49, 1
        %s108 = smul.addr %s107, 64
        %s109 = scalar_lea.vmem [#allocation2], %s108
        %p110 = scmp.lt.s32.totalorder %s15, 1
        %s111 = scalar_select %p110, %s15, 1
        %s112 = smul.addr %s111, 20
        %s113 = smul.addr %s112, 8
        %s114 = scalar_lea.vmem %s0, %s113
        %v115 = vld [vmem:[%s114] sm:$0xff]
        %v116 = vld [vmem:[%s114 + $0x8] sm:$0x3]
        %v117 = vld [vmem:[%s114 + $0x10] sm:$0xff]
        %v118 = vld [vmem:[%s114 + $0x18] sm:$0x3]
        %v119 = vld [vmem:[%s114 + $0x20] sm:$0xff]
        %v120 = vld [vmem:[%s114 + $0x28] sm:$0x3]
        %v121 = vld [vmem:[%s114 + $0x30] sm:$0xff]
        %v122 = vld [vmem:[%s114 + $0x38] sm:$0x3]
        %v123 = vld [vmem:[%s114 + $0x40] sm:$0xff]
        %v124 = vld [vmem:[%s114 + $0x48] sm:$0x3]
        %v125 = vld [vmem:[%s114 + $0x50] sm:$0xff]
        %v126 = vld [vmem:[%s114 + $0x58] sm:$0x3]
        %v127 = vld [vmem:[%s114 + $0x60] sm:$0xff]
        %v128 = vld [vmem:[%s114 + $0x68] sm:$0x3]
        %v129 = vld [vmem:[%s114 + $0x70] sm:$0xff]
        %v130 = vld [vmem:[%s114 + $0x78] sm:$0x3]
        %v131 = vld [vmem:[%s114 + $0x80] sm:$0xff]
        %v132 = vld [vmem:[%s114 + $0x88] sm:$0x3]
        %v133 = vld [vmem:[%s114 + $0x90] sm:$0xff]
        %v134 = vld [vmem:[%s114 + $0x98] sm:$0x3]
        %vm155 = vcmask 1046528
        %v156 = vrot.slane %v115, 1
        %v157 = vrot.slane %v116, 1
        %v158 = vsel %vm155, %v156, %v157
        %v159 = vrot.slane %v117, 1
        %v160 = vrot.slane %v118, 1
        %v161 = vsel %vm155, %v159, %v160
        %v162 = vrot.slane %v119, 1
        %v163 = vrot.slane %v120, 1
        %v164 = vsel %vm155, %v162, %v163
        %v165 = vrot.slane %v121, 1
        %v166 = vrot.slane %v122, 1
        %v167 = vsel %vm155, %v165, %v166
        %v168 = vrot.slane %v123, 1
        %v169 = vrot.slane %v124, 1
        %v170 = vsel %vm155, %v168, %v169
        %v171 = vrot.slane %v125, 1
        %v172 = vrot.slane %v126, 1
        %v173 = vsel %vm155, %v171, %v172
        %v174 = vrot.slane %v127, 1
        %v175 = vrot.slane %v128, 1
        %v176 = vsel %vm155, %v174, %v175
        %v177 = vrot.slane %v129, 1
        %v178 = vrot.slane %v130, 1
        %v179 = vsel %vm155, %v177, %v178
        %v180 = vrot.slane %v131, 1
        %v181 = vrot.slane %v132, 1
        %v182 = vsel %vm155, %v180, %v181
        %v183 = vrot.slane %v133, 1
        %v184 = vrot.slane %v134, 1
        %v185 = vsel %vm155, %v183, %v184
        %v196 = vadd.f32 %v115, %v158
        %v197 = vadd.f32 %v117, %v161
        %v198 = vadd.f32 %v119, %v164
        %v199 = vadd.f32 %v121, %v167
        %v200 = vadd.f32 %v123, %v170
        %v201 = vadd.f32 %v125, %v173
        %v202 = vadd.f32 %v127, %v176
        %v203 = vadd.f32 %v129, %v179
        %v204 = vadd.f32 %v131, %v182
        %v205 = vadd.f32 %v133, %v185
        %vm206 = vcmask 1045504
        %v207 = vrot.slane %v115, 2
        %v208 = vrot.slane %v116, 2
        %v209 = vsel %vm206, %v207, %v208
        %v210 = vrot.slane %v117, 2
        %v211 = vrot.slane %v118, 2
        %v212 = vsel %vm206, %v210, %v211
        %v213 = vrot.slane %v119, 2
        %v214 = vrot.slane %v120, 2
        %v215 = vsel %vm206, %v213, %v214
        %v216 = vrot.slane %v121, 2
        %v217 = vrot.slane %v122, 2
        %v218 = vsel %vm206, %v216, %v217
        %v219 = vrot.slane %v123, 2
        %v220 = vrot.slane %v124, 2
        %v221 = vsel %vm206, %v219, %v220
        %v222 = vrot.slane %v125, 2
        %v223 = vrot.slane %v126, 2
        %v224 = vsel %vm206, %v222, %v223
        %v225 = vrot.slane %v127, 2
        %v226 = vrot.slane %v128, 2
        %v227 = vsel %vm206, %v225, %v226
        %v228 = vrot.slane %v129, 2
        %v229 = vrot.slane %v130, 2
        %v230 = vsel %vm206, %v228, %v229
        %v231 = vrot.slane %v131, 2
        %v232 = vrot.slane %v132, 2
        %v233 = vsel %vm206, %v231, %v232
        %v234 = vrot.slane %v133, 2
        %v235 = vrot.slane %v134, 2
        %v236 = vsel %vm206, %v234, %v235
        %v247 = vadd.f32 %v196, %v209
        %v248 = vadd.f32 %v197, %v212
        %v249 = vadd.f32 %v198, %v215
        %v250 = vadd.f32 %v199, %v218
        %v251 = vadd.f32 %v200, %v221
        %v252 = vadd.f32 %v201, %v224
        %v253 = vadd.f32 %v202, %v227
        %v254 = vadd.f32 %v203, %v230
        %v255 = vadd.f32 %v204, %v233
        %v256 = vadd.f32 %v205, %v236
        %v257 = vadd.f32 %v247, %v248
        %v258 = vadd.f32 %v248, %v249
        %v259 = vadd.f32 %v249, %v250
        %v260 = vadd.f32 %v250, %v251
        %v261 = vadd.f32 %v251, %v252
        %v262 = vadd.f32 %v252, %v253
        %v263 = vadd.f32 %v253, %v254
        %v264 = vadd.f32 %v254, %v255
        %v265 = vadd.f32 %v257, %v249
        %v266 = vadd.f32 %v258, %v250
        %v267 = vadd.f32 %v259, %v251
        %v268 = vadd.f32 %v260, %v252
        %v269 = vadd.f32 %v261, %v253
        %v270 = vadd.f32 %v262, %v254
        %v271 = vadd.f32 %v263, %v255
        %v272 = vadd.f32 %v264, %v256
        %v273 = vmul.f32 %v265, 0.11111111
        %v274 = vmul.f32 %v266, 0.11111111
        %v275 = vmul.f32 %v267, 0.11111111
        %v276 = vmul.f32 %v268, 0.11111111
        %v277 = vmul.f32 %v269, 0.11111111
        %v278 = vmul.f32 %v270, 0.11111111
        %v279 = vmul.f32 %v271, 0.11111111
        %v280 = vmul.f32 %v272, 0.11111111
        %vm281 = vcmask 523264
        %282 = vst.msk [vmem:[%s109] sm:$0xff] %vm281, %v273
        %283 = vst.msk [vmem:[%s109 + $0x8] sm:$0xff] %vm281, %v274
        %284 = vst.msk [vmem:[%s109 + $0x10] sm:$0xff] %vm281, %v275
        %285 = vst.msk [vmem:[%s109 + $0x18] sm:$0xff] %vm281, %v276
        %286 = vst.msk [vmem:[%s109 + $0x20] sm:$0xff] %vm281, %v277
        %287 = vst.msk [vmem:[%s109 + $0x28] sm:$0xff] %vm281, %v278
        %288 = vst.msk [vmem:[%s109 + $0x30] sm:$0xff] %vm281, %v279
        %289 = vst.msk [vmem:[%s109 + $0x38] sm:$0xff] %vm281, %v280
        %s290 = sand.u32 %s49, 1
        %s291 = scalar_lea.sflag [#allocation3], %s290
        %s292 = sand.u32 %s49, 1
        %s293 = smul.addr %s292, 64
        %s294 = scalar_lea.vmem [#allocation2], %s293
        // Predicated region
        $region25: #{tpu_custom_call.1} parent=23 // pred_check
          %p295 = pneg %p59
        $region26: #{tpu_custom_call.1} parent=23 // pred_check_branch
          %297 = sbr.rel (%p295) target = $region28
        $region27: #{tpu_custom_call.1} parent=23 // pred_region
          %s299 = ssub.s32 1024, 1024
          %300 = vsyncadd %s291, %s299
          %s301 = smul.addr %s15, 8
          %s302 = smul.addr %s301, 128
          %s303 = scalar_lea.hbm %s1, %s302
          %s304 = sshll.u32 %s294, 4
          %s305 = int_to_ptr.vmem [resolvable:$true] %s304
          %310 = dma.vmem_to_hbm [thread:$0]  %s305, 1024, %s303, %s291, 128, 128, 8
        $region28: #{tpu_custom_call.1} parent=23 // pred_fallthru
          _
      $region24: #{tpu_custom_call.1} parent=5 // pred_fallthru
        _
      %p311 = scmp.le.s32.totalorder 2, %s10
      // Predicated region
      $region29: #{tpu_custom_call.1} parent=5 // pred_check
        %p312 = pneg %p311
      $region30: #{tpu_custom_call.1} parent=5 // pred_check_branch
        %314 = sbr.rel (%p312) target = $region32
      $region31: #{tpu_custom_call.1} parent=5 // pred_region
        %s315 = ssub.s32 %s10, 2
        // Predicated region
        $region33: #{tpu_custom_call.1} parent=31 // pred_check
          %p316 = pneg %p65
        $region34: #{tpu_custom_call.1} parent=31 // pred_check_branch
          %318 = sbr.rel (%p316) target = $region36
        $region35: #{tpu_custom_call.1} parent=31 // pred_region
          %s319 = sand.u32 %s50, 1
          %s320 = scalar_lea.sflag [#allocation3], %s319
          %s321 = sand.u32 %s50, 1
          %s322 = smul.addr %s321, 64
          %s323 = scalar_lea.vmem [#allocation2], %s322
          %324 = dma.done %s320, 1024
        $region36: #{tpu_custom_call.1} parent=31 // pred_fallthru
          _
      $region32: #{tpu_custom_call.1} parent=5 // pred_fallthru
        _
    $region6: #{tpu_custom_call.1} parent=1 // loop_footer
      %s14 = sadd.s32 1, %s10
    $region7: #{tpu_custom_call.1} parent=1 // loop_footer_branch
      %9 = sbr.rel target = $region3
    $region8: #{tpu_custom_call.1} parent=1 // loop_exit
      _
    %325 = vsyncpa [#allocation3], 1
    %s326 = scalar_lea.sflag [#allocation3], 1
    %327 = vsyncpa %s326, 1

</llo_original>
